<compile_context>
chip_gen: v7x
topology: tpu7x:2x2x1
jax: 0.10.0
libtpu: 0.0.40
codegen_flags: <defaults>
</compile_context>

<pallas_src>
import numpy as np
import jax
import jax.numpy as jnp
from jax import lax
from jax.experimental import pallas as pl
from jax.experimental.pallas import tpu as pltpu

EPS = 1e-3


def _make_kernel(NB, K, C_in, Wp, Q_pad, inv_count):
    """Fused conv (stride==1) + instance-norm + ReLU over NB images per step."""
    taps = [(kh, kw) for kh in range(K) for kw in range(K)]

    def kernel(x_ref, w_ref, g_ref, b_ref, m_ref, o_ref, xg_ref):
        # x_ref : (NB, C_in, FLAT)        bf16  flattened zero-padded images
        # w_ref : (C_out, K*K*C_in)       bf16  stacked per-tap weights
        # g_ref, b_ref : (C_out, 1)       f32   affine params
        # m_ref : (1, Q_pad)              f32   valid-column mask (wo < Wo and q < Q)
        # o_ref : (NB, C_out, Q_pad)      bf16  lane-dense output (NCHW-flat over Ho*Wp)
        # xg_ref: (K*K*C_in, Q_pad)       bf16  VMEM scratch: stacked shifted windows
        mask = m_ref[...]                       # (1, Q_pad)
        gamma = g_ref[...]                      # (C_out, 1)
        beta = b_ref[...]                       # (C_out, 1)

        for b in range(NB):                     # NB is small; static unroll
            # Gather the K*K shifted windows once into contiguous VMEM scratch.
            for t, (kh, kw) in enumerate(taps):
                off = kh * Wp + kw              # static offset (stride == 1)
                xg_ref[pl.ds(t * C_in, C_in), :] = x_ref[b, :, pl.ds(off, Q_pad)]

            # Single stacked MXU matmul: (C_out, K*K*C_in) @ (K*K*C_in, Q_pad), f32 acc.
            acc = jnp.dot(w_ref[...], xg_ref[...],
                          preferred_element_type=jnp.float32)   # (C_out, Q_pad)

            # Single-pass masked instance-norm statistics (valid positions only).
            acc_m = acc * mask
            s1 = jnp.sum(acc_m, axis=1, keepdims=True)           # (C_out, 1)
            s2 = jnp.sum(acc_m * acc_m, axis=1, keepdims=True)   # (C_out, 1)
            mean = s1 * inv_count
            var = jnp.maximum(s2 * inv_count - mean * mean, 0.0)
            scale = gamma * lax.rsqrt(var + EPS)                 # gamma folded into inv-std
            bias = beta - mean * scale                           # mean & beta folded
            y = jnp.maximum(acc * scale + bias, 0.0)
            o_ref[b] = y.astype(o_ref.dtype)

    return kernel


def basic_conv2d_ins(x_nchw, weight_oihw, gamma, beta, *, stride, padding):
    """Forward of BasicConv2d_Ins. x_nchw: (N, C_in, H, W), weight: (C_out, C_in, K, K)."""
    N, C_in, H, W = x_nchw.shape
    C_out, _, K, _ = weight_oihw.shape

    if stride != 1:
        # TODO(synk): general stride needs a per-phase decomposition of the padded
        # image; the fused shifted-window path below assumes stride == 1.
        raise NotImplementedError("fused Pallas path implemented for stride == 1")

    Hp, Wp = H + 2 * padding, W + 2 * padding
    Ho, Wo = Hp - K + 1, Wp - K + 1
    Q = Ho * Wp                                   # compute width (full padded rows)
    Q_pad = max(128, ((Q + 127) // 128) * 128)    # lane-dense output width
    max_off = (K - 1) * Wp + (K - 1)              # largest tap offset into flat image
    flat_needed = max_off + Q_pad
    Hp_ext = -(-flat_needed // Wp)                # ceil — extra zero rows at the bottom
    FLAT = Hp_ext * Wp
    bot_pad = Hp_ext - H - padding                # >= padding
    KKC = K * K * C_in

    # Images per grid step (amortize per-step overhead; tiny VMEM footprint here).
    NB = 1
    for cand in (8, 4, 2, 1):
        if N % cand == 0:
            NB = cand
            break

    # Host prep: cast to bf16 FIRST, then zero-pad and flatten H*W.
    xpad = jnp.pad(x_nchw.astype(jnp.bfloat16),
                   ((0, 0), (0, 0), (padding, bot_pad), (padding, padding)))
    x_flat = xpad.reshape(N, C_in, FLAT)

    # Stacked weights: w_stack[o, (kh*K + kw)*C_in + c] = weight[o, c, kh, kw]
    w_stack = jnp.transpose(weight_oihw, (0, 2, 3, 1)).reshape(C_out, KKC).astype(jnp.bfloat16)
    g = gamma.reshape(C_out, 1).astype(jnp.float32)
    b = beta.reshape(C_out, 1).astype(jnp.float32)

    # Valid-column mask over the (Ho, Wp) compute grid (+ lane padding columns).
    cols = np.arange(Q_pad)
    mask = ((cols % Wp < Wo) & (cols < Q)).astype(np.float32).reshape(1, Q_pad)
    mask = jnp.asarray(mask)

    kernel = _make_kernel(NB, K, C_in, Wp, Q_pad, 1.0 / float(Ho * Wo))

    out_flat = pl.pallas_call(
        kernel,
        out_shape=jax.ShapeDtypeStruct((N, C_out, Q_pad), jnp.bfloat16),
        grid_spec=pltpu.PrefetchScalarGridSpec(
            num_scalar_prefetch=0,
            grid=(N // NB,),
            in_specs=[
                pl.BlockSpec((NB, C_in, FLAT), lambda n: (n, 0, 0)),   # NB images / step
                pl.BlockSpec((C_out, KKC), lambda n: (0, 0)),          # stacked weights
                pl.BlockSpec((C_out, 1), lambda n: (0, 0)),            # gamma
                pl.BlockSpec((C_out, 1), lambda n: (0, 0)),            # beta
                pl.BlockSpec((1, Q_pad), lambda n: (0, 0)),            # valid mask
            ],
            out_specs=pl.BlockSpec((NB, C_out, Q_pad), lambda n: (n, 0, 0)),
            scratch_shapes=[pltpu.VMEM((KKC, Q_pad), jnp.bfloat16)],   # stacked windows
        ),
        compiler_params=pltpu.CompilerParams(dimension_semantics=("parallel",)),
    )(x_flat, w_stack, g, b, mask)

    # Output is already NCHW-flat: just drop the wrap/padding columns.
    # TODO(synk): a fused consumer could read the padded (C_out, Ho, Wp) layout
    # directly and skip this crop pass.
    out = out_flat[:, :, :Q].reshape(N, C_out, Ho, Wp)[:, :, :, :Wo]
    return out


def _reference(x_nchw, weight_oihw, gamma, beta, *, stride, padding):
    # The kernel feeds bf16-rounded x/w to the MXU (f32 accumulate); make the
    # reference consistent so the comparison isolates kernel correctness.
    x = x_nchw.astype(jnp.bfloat16).astype(jnp.float32)
    w = weight_oihw.astype(jnp.bfloat16).astype(jnp.float32)
    conv = lax.conv_general_dilated(
        x, w, (stride, stride), [(padding, padding), (padding, padding)],
        dimension_numbers=("NCHW", "OIHW", "NCHW"),
        precision=lax.Precision.HIGHEST)
    mean = conv.mean(axis=(2, 3), keepdims=True)
    var = ((conv - mean) ** 2).mean(axis=(2, 3), keepdims=True)
    y = (conv - mean) / jnp.sqrt(var + EPS)
    y = y * gamma[None, :, None, None] + beta[None, :, None, None]
    return jnp.maximum(y, 0.0)


if __name__ == "__main__":
    # Small config consistent with the module: in_planes=4, out_planes=8, k=3, stride=1, pad=1
    N, C_in, H, W = 2, 4, 16, 16
    C_out, K, stride, pad = 8, 3, 1, 1

    key = jax.random.PRNGKey(0)
    kx, kw, kg, kb = jax.random.split(key, 4)
    x = jax.random.normal(kx, (N, C_in, H, W), dtype=jnp.float32)
    weight = jax.random.normal(kw, (C_out, C_in, K, K), dtype=jnp.float32) * 0.1
    gamma = 1.0 + 0.1 * jax.random.normal(kg, (C_out,), dtype=jnp.float32)
    beta = 0.1 * jax.random.normal(kb, (C_out,), dtype=jnp.float32)

    out = basic_conv2d_ins(x, weight, gamma, beta, stride=stride, padding=pad)
    out = jax.block_until_ready(out)

    ref = jax.block_until_ready(_reference(x, weight, gamma, beta, stride=stride, padding=pad))
    # Output is bf16 (statistics in f32) -> compare with bf16-appropriate tolerance.
    np.testing.assert_allclose(np.asarray(out, dtype=np.float32), np.asarray(ref),
                               rtol=2e-2, atol=2e-2)

    print("KERNEL_OK")
</pallas_src>

<mosaic_0001>
module attributes {stable_mosaic.version = 11 : i64} {
  func.func @kernel(%arg0: i32, %arg1: memref<2x4x432xbf16, #tpu.memory_space<vmem>>, %arg2: memref<8x36xbf16, #tpu.memory_space<vmem>>, %arg3: memref<8x1xf32, #tpu.memory_space<vmem>>, %arg4: memref<8x1xf32, #tpu.memory_space<vmem>>, %arg5: memref<1x384xf32, #tpu.memory_space<vmem>>, %arg6: memref<2x8x384xbf16, #tpu.memory_space<vmem>>, %arg7: memref<36x384xbf16, #tpu.memory_space<vmem>>) attributes {dimension_semantics = [#tpu.dimension_semantics<parallel>], iteration_bounds = array<i64: 1>, scalar_prefetch = 0 : i64, scratch_operands = 1 : i64, tpu.core_type = #tpu.core_type<tc>, window_params = [{transform_indices = @transform_0, window_bounds = array<i64: 2, 4, 432>}, {pipeline_mode = #tpu.pipeline_mode<synchronous>, transform_indices = @transform_1, window_bounds = array<i64: 8, 36>}, {pipeline_mode = #tpu.pipeline_mode<synchronous>, transform_indices = @transform_2, window_bounds = array<i64: 8, 1>}, {pipeline_mode = #tpu.pipeline_mode<synchronous>, transform_indices = @transform_3, window_bounds = array<i64: 8, 1>}, {pipeline_mode = #tpu.pipeline_mode<synchronous>, transform_indices = @transform_4, window_bounds = array<i64: 1, 384>}, {transform_indices = @transform_5, window_bounds = array<i64: 2, 8, 384>}]} {
    %c0 = arith.constant 0 : index
    %c0_0 = arith.constant 0 : index
    %0 = vector.load %arg5[%c0, %c0_0] : memref<1x384xf32, #tpu.memory_space<vmem>>, vector<1x384xf32>
    %c0_1 = arith.constant 0 : index
    %c0_2 = arith.constant 0 : index
    %1 = vector.load %arg3[%c0_1, %c0_2] : memref<8x1xf32, #tpu.memory_space<vmem>>, vector<8x1xf32>
    %c0_3 = arith.constant 0 : index
    %c0_4 = arith.constant 0 : index
    %2 = vector.load %arg4[%c0_3, %c0_4] : memref<8x1xf32, #tpu.memory_space<vmem>>, vector<8x1xf32>
    %c0_5 = arith.constant 0 : index
    %c0_6 = arith.constant 0 : index
    %c0_7 = arith.constant 0 : index
    %3 = vector.load %arg1[%c0_5, %c0_6, %c0_7] : memref<2x4x432xbf16, #tpu.memory_space<vmem>>, vector<1x4x384xbf16>
    %4 = vector.shape_cast %3 : vector<1x4x384xbf16> to vector<4x384xbf16>
    %c0_8 = arith.constant 0 : index
    %c0_9 = arith.constant 0 : index
    %5 = vector.load %arg7[%c0_8, %c0_9] : memref<36x384xbf16, #tpu.memory_space<vmem>>, vector<4x384xbf16>
    tpu.vector_store %arg7[%c0_8, %c0_9], %4 {strides = array<i32>} : memref<36x384xbf16, #tpu.memory_space<vmem>>, vector<4x384xbf16>,
    %c0_10 = arith.constant 0 : index
    %c0_11 = arith.constant 0 : index
    %c1 = arith.constant 1 : index
    %6 = vector.load %arg1[%c0_10, %c0_11, %c1] : memref<2x4x432xbf16, #tpu.memory_space<vmem>>, vector<1x4x384xbf16>
    %7 = vector.shape_cast %6 : vector<1x4x384xbf16> to vector<4x384xbf16>
    %c4 = arith.constant 4 : index
    %c0_12 = arith.constant 0 : index
    %8 = vector.load %arg7[%c4, %c0_12] : memref<36x384xbf16, #tpu.memory_space<vmem>>, vector<4x384xbf16>
    tpu.vector_store %arg7[%c4, %c0_12], %7 {strides = array<i32>} : memref<36x384xbf16, #tpu.memory_space<vmem>>, vector<4x384xbf16>,
    %c0_13 = arith.constant 0 : index
    %c0_14 = arith.constant 0 : index
    %c2 = arith.constant 2 : index
    %9 = vector.load %arg1[%c0_13, %c0_14, %c2] : memref<2x4x432xbf16, #tpu.memory_space<vmem>>, vector<1x4x384xbf16>
    %10 = vector.shape_cast %9 : vector<1x4x384xbf16> to vector<4x384xbf16>
    %c8 = arith.constant 8 : index
    %c0_15 = arith.constant 0 : index
    %11 = vector.load %arg7[%c8, %c0_15] : memref<36x384xbf16, #tpu.memory_space<vmem>>, vector<4x384xbf16>
    tpu.vector_store %arg7[%c8, %c0_15], %10 {strides = array<i32>} : memref<36x384xbf16, #tpu.memory_space<vmem>>, vector<4x384xbf16>,
    %c0_16 = arith.constant 0 : index
    %c0_17 = arith.constant 0 : index
    %c18 = arith.constant 18 : index
    %12 = vector.load %arg1[%c0_16, %c0_17, %c18] : memref<2x4x432xbf16, #tpu.memory_space<vmem>>, vector<1x4x384xbf16>
    %13 = vector.shape_cast %12 : vector<1x4x384xbf16> to vector<4x384xbf16>
    %c12 = arith.constant 12 : index
    %c0_18 = arith.constant 0 : index
    %14 = vector.load %arg7[%c12, %c0_18] : memref<36x384xbf16, #tpu.memory_space<vmem>>, vector<4x384xbf16>
    tpu.vector_store %arg7[%c12, %c0_18], %13 {strides = array<i32>} : memref<36x384xbf16, #tpu.memory_space<vmem>>, vector<4x384xbf16>,
    %c0_19 = arith.constant 0 : index
    %c0_20 = arith.constant 0 : index
    %c19 = arith.constant 19 : index
    %15 = vector.load %arg1[%c0_19, %c0_20, %c19] : memref<2x4x432xbf16, #tpu.memory_space<vmem>>, vector<1x4x384xbf16>
    %16 = vector.shape_cast %15 : vector<1x4x384xbf16> to vector<4x384xbf16>
    %c16 = arith.constant 16 : index
    %c0_21 = arith.constant 0 : index
    %17 = vector.load %arg7[%c16, %c0_21] : memref<36x384xbf16, #tpu.memory_space<vmem>>, vector<4x384xbf16>
    tpu.vector_store %arg7[%c16, %c0_21], %16 {strides = array<i32>} : memref<36x384xbf16, #tpu.memory_space<vmem>>, vector<4x384xbf16>,
    %c0_22 = arith.constant 0 : index
    %c0_23 = arith.constant 0 : index
    %c20 = arith.constant 20 : index
    %18 = vector.load %arg1[%c0_22, %c0_23, %c20] : memref<2x4x432xbf16, #tpu.memory_space<vmem>>, vector<1x4x384xbf16>
    %19 = vector.shape_cast %18 : vector<1x4x384xbf16> to vector<4x384xbf16>
    %c20_24 = arith.constant 20 : index
    %c0_25 = arith.constant 0 : index
    %20 = vector.load %arg7[%c20_24, %c0_25] : memref<36x384xbf16, #tpu.memory_space<vmem>>, vector<4x384xbf16>
    tpu.vector_store %arg7[%c20_24, %c0_25], %19 {strides = array<i32>} : memref<36x384xbf16, #tpu.memory_space<vmem>>, vector<4x384xbf16>,
    %c0_26 = arith.constant 0 : index
    %c0_27 = arith.constant 0 : index
    %c36 = arith.constant 36 : index
    %21 = vector.load %arg1[%c0_26, %c0_27, %c36] : memref<2x4x432xbf16, #tpu.memory_space<vmem>>, vector<1x4x384xbf16>
    %22 = vector.shape_cast %21 : vector<1x4x384xbf16> to vector<4x384xbf16>
    %c24 = arith.constant 24 : index
    %c0_28 = arith.constant 0 : index
    %23 = vector.load %arg7[%c24, %c0_28] : memref<36x384xbf16, #tpu.memory_space<vmem>>, vector<4x384xbf16>
    tpu.vector_store %arg7[%c24, %c0_28], %22 {strides = array<i32>} : memref<36x384xbf16, #tpu.memory_space<vmem>>, vector<4x384xbf16>,
    %c0_29 = arith.constant 0 : index
    %c0_30 = arith.constant 0 : index
    %c37 = arith.constant 37 : index
    %24 = vector.load %arg1[%c0_29, %c0_30, %c37] : memref<2x4x432xbf16, #tpu.memory_space<vmem>>, vector<1x4x384xbf16>
    %25 = vector.shape_cast %24 : vector<1x4x384xbf16> to vector<4x384xbf16>
    %c28 = arith.constant 28 : index
    %c0_31 = arith.constant 0 : index
    %26 = vector.load %arg7[%c28, %c0_31] : memref<36x384xbf16, #tpu.memory_space<vmem>>, vector<4x384xbf16>
    tpu.vector_store %arg7[%c28, %c0_31], %25 {strides = array<i32>} : memref<36x384xbf16, #tpu.memory_space<vmem>>, vector<4x384xbf16>,
    %c0_32 = arith.constant 0 : index
    %c0_33 = arith.constant 0 : index
    %c38 = arith.constant 38 : index
    %27 = vector.load %arg1[%c0_32, %c0_33, %c38] : memref<2x4x432xbf16, #tpu.memory_space<vmem>>, vector<1x4x384xbf16>
    %28 = vector.shape_cast %27 : vector<1x4x384xbf16> to vector<4x384xbf16>
    %c32 = arith.constant 32 : index
    %c0_34 = arith.constant 0 : index
    %29 = vector.load %arg7[%c32, %c0_34] : memref<36x384xbf16, #tpu.memory_space<vmem>>, vector<4x384xbf16>
    tpu.vector_store %arg7[%c32, %c0_34], %28 {strides = array<i32>} : memref<36x384xbf16, #tpu.memory_space<vmem>>, vector<4x384xbf16>,
    %c0_35 = arith.constant 0 : index
    %c0_36 = arith.constant 0 : index
    %30 = vector.load %arg2[%c0_35, %c0_36] : memref<8x36xbf16, #tpu.memory_space<vmem>>, vector<8x36xbf16>
    %c0_37 = arith.constant 0 : index
    %c0_38 = arith.constant 0 : index
    %31 = vector.load %arg7[%c0_37, %c0_38] : memref<36x384xbf16, #tpu.memory_space<vmem>>, vector<36x384xbf16>
    %cst = arith.constant dense<0.000000e+00> : vector<8x384xf32>
    %32 = tpu.matmul %30, %31, %cst {dimension_numbers = #tpu.dot_dimension_numbers<[1], [0], [0], [1], [0, 0, 1, 1], [], []>} : vector<8x36xbf16>, vector<36x384xbf16>, vector<8x384xf32> -> vector<8x384xf32>
    %33 = vector.broadcast %0 : vector<1x384xf32> to vector<8x384xf32>
    %34 = arith.mulf %32, %33 : vector<8x384xf32>
    %cst_39 = arith.constant dense<0.000000e+00> : vector<8xf32>
    %35 = vector.multi_reduction <add>, %34, %cst_39 [1] : vector<8x384xf32> to vector<8xf32>
    %36 = vector.shape_cast %35 : vector<8xf32> to vector<8x1xf32>
    %37 = arith.mulf %34, %34 : vector<8x384xf32>
    %cst_40 = arith.constant dense<0.000000e+00> : vector<8xf32>
    %38 = vector.multi_reduction <add>, %37, %cst_40 [1] : vector<8x384xf32> to vector<8xf32>
    %39 = vector.shape_cast %38 : vector<8xf32> to vector<8x1xf32>
    %cst_41 = arith.constant 3.906250e-03 : f32
    %40 = vector.broadcast %cst_41 : f32 to vector<8x1xf32>
    %41 = arith.mulf %36, %40 : vector<8x1xf32>
    %cst_42 = arith.constant 3.906250e-03 : f32
    %42 = vector.broadcast %cst_42 : f32 to vector<8x1xf32>
    %43 = arith.mulf %39, %42 : vector<8x1xf32>
    %44 = arith.mulf %41, %41 : vector<8x1xf32>
    %45 = arith.subf %43, %44 : vector<8x1xf32>
    %cst_43 = arith.constant 0.000000e+00 : f32
    %46 = vector.broadcast %cst_43 : f32 to vector<8x1xf32>
    %47 = arith.maximumf %45, %46 : vector<8x1xf32>
    %cst_44 = arith.constant 1.000000e-03 : f32
    %48 = vector.broadcast %cst_44 : f32 to vector<8x1xf32>
    %49 = arith.addf %47, %48 : vector<8x1xf32>
    %50 = math.rsqrt %49 : vector<8x1xf32>
    %51 = arith.mulf %1, %50 : vector<8x1xf32>
    %52 = arith.mulf %41, %51 : vector<8x1xf32>
    %53 = arith.subf %2, %52 : vector<8x1xf32>
    %54 = vector.broadcast %51 : vector<8x1xf32> to vector<8x384xf32>
    %55 = arith.mulf %32, %54 : vector<8x384xf32>
    %56 = vector.broadcast %53 : vector<8x1xf32> to vector<8x384xf32>
    %57 = arith.addf %55, %56 : vector<8x384xf32>
    %cst_45 = arith.constant 0.000000e+00 : f32
    %58 = vector.broadcast %cst_45 : f32 to vector<8x384xf32>
    %59 = arith.maximumf %57, %58 : vector<8x384xf32>
    %60 = arith.truncf %59 : vector<8x384xf32> to vector<8x384xbf16>
    %c0_46 = arith.constant 0 : index
    %c0_47 = arith.constant 0 : index
    %c0_48 = arith.constant 0 : index
    %61 = vector.load %arg6[%c0_46, %c0_47, %c0_48] : memref<2x8x384xbf16, #tpu.memory_space<vmem>>, vector<1x8x384xbf16>
    %62 = vector.shape_cast %61 : vector<1x8x384xbf16> to vector<8x384xbf16>
    %63 = vector.shape_cast %60 : vector<8x384xbf16> to vector<1x8x384xbf16>
    tpu.vector_store %arg6[%c0_46, %c0_47, %c0_48], %63 {strides = array<i32>} : memref<2x8x384xbf16, #tpu.memory_space<vmem>>, vector<1x8x384xbf16>,
    %c1_49 = arith.constant 1 : index
    %c0_50 = arith.constant 0 : index
    %c0_51 = arith.constant 0 : index
    %64 = vector.load %arg1[%c1_49, %c0_50, %c0_51] : memref<2x4x432xbf16, #tpu.memory_space<vmem>>, vector<1x4x384xbf16>
    %65 = vector.shape_cast %64 : vector<1x4x384xbf16> to vector<4x384xbf16>
    %c0_52 = arith.constant 0 : index
    %c0_53 = arith.constant 0 : index
    %66 = vector.load %arg7[%c0_52, %c0_53] : memref<36x384xbf16, #tpu.memory_space<vmem>>, vector<4x384xbf16>
    tpu.vector_store %arg7[%c0_52, %c0_53], %65 {strides = array<i32>} : memref<36x384xbf16, #tpu.memory_space<vmem>>, vector<4x384xbf16>,
    %c1_54 = arith.constant 1 : index
    %c0_55 = arith.constant 0 : index
    %c1_56 = arith.constant 1 : index
    %67 = vector.load %arg1[%c1_54, %c0_55, %c1_56] : memref<2x4x432xbf16, #tpu.memory_space<vmem>>, vector<1x4x384xbf16>
    %68 = vector.shape_cast %67 : vector<1x4x384xbf16> to vector<4x384xbf16>
    %c4_57 = arith.constant 4 : index
    %c0_58 = arith.constant 0 : index
    %69 = vector.load %arg7[%c4_57, %c0_58] : memref<36x384xbf16, #tpu.memory_space<vmem>>, vector<4x384xbf16>
    tpu.vector_store %arg7[%c4_57, %c0_58], %68 {strides = array<i32>} : memref<36x384xbf16, #tpu.memory_space<vmem>>, vector<4x384xbf16>,
    %c1_59 = arith.constant 1 : index
    %c0_60 = arith.constant 0 : index
    %c2_61 = arith.constant 2 : index
    %70 = vector.load %arg1[%c1_59, %c0_60, %c2_61] : memref<2x4x432xbf16, #tpu.memory_space<vmem>>, vector<1x4x384xbf16>
    %71 = vector.shape_cast %70 : vector<1x4x384xbf16> to vector<4x384xbf16>
    %c8_62 = arith.constant 8 : index
    %c0_63 = arith.constant 0 : index
    %72 = vector.load %arg7[%c8_62, %c0_63] : memref<36x384xbf16, #tpu.memory_space<vmem>>, vector<4x384xbf16>
    tpu.vector_store %arg7[%c8_62, %c0_63], %71 {strides = array<i32>} : memref<36x384xbf16, #tpu.memory_space<vmem>>, vector<4x384xbf16>,
    %c1_64 = arith.constant 1 : index
    %c0_65 = arith.constant 0 : index
    %c18_66 = arith.constant 18 : index
    %73 = vector.load %arg1[%c1_64, %c0_65, %c18_66] : memref<2x4x432xbf16, #tpu.memory_space<vmem>>, vector<1x4x384xbf16>
    %74 = vector.shape_cast %73 : vector<1x4x384xbf16> to vector<4x384xbf16>
    %c12_67 = arith.constant 12 : index
    %c0_68 = arith.constant 0 : index
    %75 = vector.load %arg7[%c12_67, %c0_68] : memref<36x384xbf16, #tpu.memory_space<vmem>>, vector<4x384xbf16>
    tpu.vector_store %arg7[%c12_67, %c0_68], %74 {strides = array<i32>} : memref<36x384xbf16, #tpu.memory_space<vmem>>, vector<4x384xbf16>,
    %c1_69 = arith.constant 1 : index
    %c0_70 = arith.constant 0 : index
    %c19_71 = arith.constant 19 : index
    %76 = vector.load %arg1[%c1_69, %c0_70, %c19_71] : memref<2x4x432xbf16, #tpu.memory_space<vmem>>, vector<1x4x384xbf16>
    %77 = vector.shape_cast %76 : vector<1x4x384xbf16> to vector<4x384xbf16>
    %c16_72 = arith.constant 16 : index
    %c0_73 = arith.constant 0 : index
    %78 = vector.load %arg7[%c16_72, %c0_73] : memref<36x384xbf16, #tpu.memory_space<vmem>>, vector<4x384xbf16>
    tpu.vector_store %arg7[%c16_72, %c0_73], %77 {strides = array<i32>} : memref<36x384xbf16, #tpu.memory_space<vmem>>, vector<4x384xbf16>,
    %c1_74 = arith.constant 1 : index
    %c0_75 = arith.constant 0 : index
    %c20_76 = arith.constant 20 : index
    %79 = vector.load %arg1[%c1_74, %c0_75, %c20_76] : memref<2x4x432xbf16, #tpu.memory_space<vmem>>, vector<1x4x384xbf16>
    %80 = vector.shape_cast %79 : vector<1x4x384xbf16> to vector<4x384xbf16>
    %c20_77 = arith.constant 20 : index
    %c0_78 = arith.constant 0 : index
    %81 = vector.load %arg7[%c20_77, %c0_78] : memref<36x384xbf16, #tpu.memory_space<vmem>>, vector<4x384xbf16>
    tpu.vector_store %arg7[%c20_77, %c0_78], %80 {strides = array<i32>} : memref<36x384xbf16, #tpu.memory_space<vmem>>, vector<4x384xbf16>,
    %c1_79 = arith.constant 1 : index
    %c0_80 = arith.constant 0 : index
    %c36_81 = arith.constant 36 : index
    %82 = vector.load %arg1[%c1_79, %c0_80, %c36_81] : memref<2x4x432xbf16, #tpu.memory_space<vmem>>, vector<1x4x384xbf16>
    %83 = vector.shape_cast %82 : vector<1x4x384xbf16> to vector<4x384xbf16>
    %c24_82 = arith.constant 24 : index
    %c0_83 = arith.constant 0 : index
    %84 = vector.load %arg7[%c24_82, %c0_83] : memref<36x384xbf16, #tpu.memory_space<vmem>>, vector<4x384xbf16>
    tpu.vector_store %arg7[%c24_82, %c0_83], %83 {strides = array<i32>} : memref<36x384xbf16, #tpu.memory_space<vmem>>, vector<4x384xbf16>,
    %c1_84 = arith.constant 1 : index
    %c0_85 = arith.constant 0 : index
    %c37_86 = arith.constant 37 : index
    %85 = vector.load %arg1[%c1_84, %c0_85, %c37_86] : memref<2x4x432xbf16, #tpu.memory_space<vmem>>, vector<1x4x384xbf16>
    %86 = vector.shape_cast %85 : vector<1x4x384xbf16> to vector<4x384xbf16>
    %c28_87 = arith.constant 28 : index
    %c0_88 = arith.constant 0 : index
    %87 = vector.load %arg7[%c28_87, %c0_88] : memref<36x384xbf16, #tpu.memory_space<vmem>>, vector<4x384xbf16>
    tpu.vector_store %arg7[%c28_87, %c0_88], %86 {strides = array<i32>} : memref<36x384xbf16, #tpu.memory_space<vmem>>, vector<4x384xbf16>,
    %c1_89 = arith.constant 1 : index
    %c0_90 = arith.constant 0 : index
    %c38_91 = arith.constant 38 : index
    %88 = vector.load %arg1[%c1_89, %c0_90, %c38_91] : memref<2x4x432xbf16, #tpu.memory_space<vmem>>, vector<1x4x384xbf16>
    %89 = vector.shape_cast %88 : vector<1x4x384xbf16> to vector<4x384xbf16>
    %c32_92 = arith.constant 32 : index
    %c0_93 = arith.constant 0 : index
    %90 = vector.load %arg7[%c32_92, %c0_93] : memref<36x384xbf16, #tpu.memory_space<vmem>>, vector<4x384xbf16>
    tpu.vector_store %arg7[%c32_92, %c0_93], %89 {strides = array<i32>} : memref<36x384xbf16, #tpu.memory_space<vmem>>, vector<4x384xbf16>,
    %c0_94 = arith.constant 0 : index
    %c0_95 = arith.constant 0 : index
    %91 = vector.load %arg2[%c0_94, %c0_95] : memref<8x36xbf16, #tpu.memory_space<vmem>>, vector<8x36xbf16>
    %c0_96 = arith.constant 0 : index
    %c0_97 = arith.constant 0 : index
    %92 = vector.load %arg7[%c0_96, %c0_97] : memref<36x384xbf16, #tpu.memory_space<vmem>>, vector<36x384xbf16>
    %cst_98 = arith.constant dense<0.000000e+00> : vector<8x384xf32>
    %93 = tpu.matmul %91, %92, %cst_98 {dimension_numbers = #tpu.dot_dimension_numbers<[1], [0], [0], [1], [0, 0, 1, 1], [], []>} : vector<8x36xbf16>, vector<36x384xbf16>, vector<8x384xf32> -> vector<8x384xf32>
    %94 = vector.broadcast %0 : vector<1x384xf32> to vector<8x384xf32>
    %95 = arith.mulf %93, %94 : vector<8x384xf32>
    %cst_99 = arith.constant dense<0.000000e+00> : vector<8xf32>
    %96 = vector.multi_reduction <add>, %95, %cst_99 [1] : vector<8x384xf32> to vector<8xf32>
    %97 = vector.shape_cast %96 : vector<8xf32> to vector<8x1xf32>
    %98 = arith.mulf %95, %95 : vector<8x384xf32>
    %cst_100 = arith.constant dense<0.000000e+00> : vector<8xf32>
    %99 = vector.multi_reduction <add>, %98, %cst_100 [1] : vector<8x384xf32> to vector<8xf32>
    %100 = vector.shape_cast %99 : vector<8xf32> to vector<8x1xf32>
    %cst_101 = arith.constant 3.906250e-03 : f32
    %101 = vector.broadcast %cst_101 : f32 to vector<8x1xf32>
    %102 = arith.mulf %97, %101 : vector<8x1xf32>
    %cst_102 = arith.constant 3.906250e-03 : f32
    %103 = vector.broadcast %cst_102 : f32 to vector<8x1xf32>
    %104 = arith.mulf %100, %103 : vector<8x1xf32>
    %105 = arith.mulf %102, %102 : vector<8x1xf32>
    %106 = arith.subf %104, %105 : vector<8x1xf32>
    %cst_103 = arith.constant 0.000000e+00 : f32
    %107 = vector.broadcast %cst_103 : f32 to vector<8x1xf32>
    %108 = arith.maximumf %106, %107 : vector<8x1xf32>
    %cst_104 = arith.constant 1.000000e-03 : f32
    %109 = vector.broadcast %cst_104 : f32 to vector<8x1xf32>
    %110 = arith.addf %108, %109 : vector<8x1xf32>
    %111 = math.rsqrt %110 : vector<8x1xf32>
    %112 = arith.mulf %1, %111 : vector<8x1xf32>
    %113 = arith.mulf %102, %112 : vector<8x1xf32>
    %114 = arith.subf %2, %113 : vector<8x1xf32>
    %115 = vector.broadcast %112 : vector<8x1xf32> to vector<8x384xf32>
    %116 = arith.mulf %93, %115 : vector<8x384xf32>
    %117 = vector.broadcast %114 : vector<8x1xf32> to vector<8x384xf32>
    %118 = arith.addf %116, %117 : vector<8x384xf32>
    %cst_105 = arith.constant 0.000000e+00 : f32
    %119 = vector.broadcast %cst_105 : f32 to vector<8x384xf32>
    %120 = arith.maximumf %118, %119 : vector<8x384xf32>
    %121 = arith.truncf %120 : vector<8x384xf32> to vector<8x384xbf16>
    %c1_106 = arith.constant 1 : index
    %c0_107 = arith.constant 0 : index
    %c0_108 = arith.constant 0 : index
    %122 = vector.load %arg6[%c1_106, %c0_107, %c0_108] : memref<2x8x384xbf16, #tpu.memory_space<vmem>>, vector<1x8x384xbf16>
    %123 = vector.shape_cast %122 : vector<1x8x384xbf16> to vector<8x384xbf16>
    %124 = vector.shape_cast %121 : vector<8x384xbf16> to vector<1x8x384xbf16>
    tpu.vector_store %arg6[%c1_106, %c0_107, %c0_108], %124 {strides = array<i32>} : memref<2x8x384xbf16, #tpu.memory_space<vmem>>, vector<1x8x384xbf16>,
    return
  }
  func.func @transform_0(%arg0: i32) -> (i32, i32, i32) {
    %c0_i32 = arith.constant 0 : i32
    %c0_i32_0 = arith.constant 0 : i32
    %c0_i32_1 = arith.constant 0 : i32
    return %arg0, %c0_i32, %c0_i32_0 : i32, i32, i32
  }
  func.func @transform_1(%arg0: i32) -> (i32, i32) {
    %c0_i32 = arith.constant 0 : i32
    %c0_i32_0 = arith.constant 0 : i32
    %c0_i32_1 = arith.constant 0 : i32
    return %c0_i32, %c0_i32_0 : i32, i32
  }
  func.func @transform_2(%arg0: i32) -> (i32, i32) {
    %c0_i32 = arith.constant 0 : i32
    %c0_i32_0 = arith.constant 0 : i32
    %c0_i32_1 = arith.constant 0 : i32
    return %c0_i32, %c0_i32_0 : i32, i32
  }
  func.func @transform_3(%arg0: i32) -> (i32, i32) {
    %c0_i32 = arith.constant 0 : i32
    %c0_i32_0 = arith.constant 0 : i32
    %c0_i32_1 = arith.constant 0 : i32
    return %c0_i32, %c0_i32_0 : i32, i32
  }
  func.func @transform_4(%arg0: i32) -> (i32, i32) {
    %c0_i32 = arith.constant 0 : i32
    %c0_i32_0 = arith.constant 0 : i32
    %c0_i32_1 = arith.constant 0 : i32
    return %c0_i32, %c0_i32_0 : i32, i32
  }
  func.func @transform_5(%arg0: i32) -> (i32, i32, i32) {
    %c0_i32 = arith.constant 0 : i32
    %c0_i32_0 = arith.constant 0 : i32
    %c0_i32_1 = arith.constant 0 : i32
    return %arg0, %c0_i32, %c0_i32_0 : i32, i32, i32
  }
}

</mosaic_0001>

<llo_original>
// kernel: tpu_custom_call.1
$region0: #{tpu_custom_call.1}
  #allocation0 [shape = 'u32[]', space=smem, size = 0x4, offset = 0x4, fixed_abs, tag = 'smem constant byte address 0x4 - core index']
  #allocation1 [shape = 'u32[144,128]{1,0:T(1,128)}', space=vmem, size = 0x12000, scoped, tag = 'internal scratch']
  #allocation2 [shape = 'bf16[36,384]{1,0:T(8,128)(2,1)}', space=vmem, size = 0x7800, scoped, tag = 'scratch operand']
  %s0 = inlined_call_operand.vmem [shape: bf16[2,4,432], index: 0, kind: input, shape index: {}]
  %s1 = inlined_call_operand.vmem [shape: bf16[8,36], index: 1, kind: input, shape index: {}]
  %s2 = inlined_call_operand.vmem [shape: f32[8,1], index: 2, kind: input, shape index: {}]
  %s3 = inlined_call_operand.vmem [shape: f32[8,1], index: 3, kind: input, shape index: {}]
  %s4 = inlined_call_operand.vmem [shape: f32[1,384], index: 4, kind: input, shape index: {}]
  %s5 = inlined_call_operand.hbm [shape: bf16[2,8,384], index: 5, kind: output, shape index: {}]
  %s6 = sld [smem:[#allocation0]]
  $region30: #{tpu_custom_call.1} parent=0
    _
  %s8 = ssub.s32 1, %s6
  %s9 = scalar_select 0, %s8, %s6
  $region1: #{tpu_custom_call.1} parent=0
    #allocation3 [shape = 'u8[12288]{0}', space=vmem, size = 0x3000, scoped, tag = 'output window, operand 0, single buffered']
    #allocation4 [shape = 's32[1]{0}', space=sflag, size = 0x4, scoped, tag = 'scoped memory for tpu_custom_call.1']
    %10 = vsyncpa [#allocation4], 0
    // Predicated region
    $region2: #{tpu_custom_call.1} parent=1 // pred_check
      _
    $region3: #{tpu_custom_call.1} parent=1 // pred_check_branch
      %12 = sbr.rel (0) target = $region5
    $region4: #{tpu_custom_call.1} parent=1 // pred_region
      _
    $region5: #{tpu_custom_call.1} parent=1 // pred_fallthru
      _
    // Predicated region
    $region6: #{tpu_custom_call.1} parent=1 // pred_check
      _
    $region7: #{tpu_custom_call.1} parent=1 // pred_check_branch
      %14 = sbr.rel (0) target = $region9
    $region8: #{tpu_custom_call.1} parent=1 // pred_region
      _
    $region9: #{tpu_custom_call.1} parent=1 // pred_fallthru
      _
    // Predicated region
    $region10: #{tpu_custom_call.1} parent=1 // pred_check
      _
    $region11: #{tpu_custom_call.1} parent=1 // pred_check_branch
      %16 = sbr.rel (0) target = $region13
    $region12: #{tpu_custom_call.1} parent=1 // pred_region
      _
    $region13: #{tpu_custom_call.1} parent=1 // pred_fallthru
      _
    // Predicated region
    $region14: #{tpu_custom_call.1} parent=1 // pred_check
      _
    $region15: #{tpu_custom_call.1} parent=1 // pred_check_branch
      %18 = sbr.rel (0) target = $region17
    $region16: #{tpu_custom_call.1} parent=1 // pred_region
      _
    $region17: #{tpu_custom_call.1} parent=1 // pred_fallthru
      _
    // Predicated region
    $region18: #{tpu_custom_call.1} parent=1 // pred_check
      _
    $region19: #{tpu_custom_call.1} parent=1 // pred_check_branch
      %20 = sbr.rel (0) target = $region21
    $region20: #{tpu_custom_call.1} parent=1 // pred_region
      _
    $region21: #{tpu_custom_call.1} parent=1 // pred_fallthru
      _
    %v22 = vld [vmem:[%s4] sm:$0x7]
    %v23 = vld [vmem:[%s2] sm:$0xff]
    %v24 = vld [vmem:[%s3] sm:$0xff]
    %v25 = vld [vmem:[%s0] sm:$0x3f]
    %v27 = vcombine.high %v25, %v25
    %v29 = vunpack.c.l.s4 1983009808
    %v30 = vunpack.c.0.s8 %v29
    %v31 = vlaneseq
    %v32 = vshrl.u32 %v31, 7
    %v33 = vsub.s32 %v30, %v32
    %v34 = vrot.slane %v25, %v33
    %v36 = vunpack.c.l.s4 1983009808
    %v37 = vunpack.c.0.s8 %v36
    %v38 = vlaneseq
    %v39 = vshrl.u32 %v38, 7
    %v40 = vsub.s32 %v37, %v39
    %v41 = vrot.slane %v27, %v40
    %44 = vst [vmem:[#allocation2] sm:$0x33] %v34
    %45 = vst [vmem:[#allocation2 + $0x8] sm:$0x3] %v41
    %v46 = vld [vmem:[%s0] sm:$0xff]
    %v48 = vcombine.low %v46, %v46
    %v50 = vunpack.c.l.s4 1983009808
    %v51 = vunpack.c.0.s8 %v50
    %v52 = vlaneseq
    %v53 = vshrl.u32 %v52, 7
    %v54 = vsub.s32 %v51, %v53
    %v55 = vrot.slane %v48, %v54
    %v57 = vunpack.c.l.s4 1983009808
    %v58 = vunpack.c.0.s8 %v57
    %v59 = vlaneseq
    %v60 = vshrl.u32 %v59, 7
    %v61 = vsub.s32 %v58, %v60
    %v62 = vrot.slane %v46, %v61
    %63 = vrot.lane.b32.xlu0 %v55, 127
    %v64 = vpop.permute.xlu0 %63
    %65 = vrot.lane.b32.xlu0 %v62, 127
    %v66 = vpop.permute.xlu0 %65
    %v67 = vrot.slane %v64, 4
    %v68 = vrot.slane %v66, 4
    %vm69 = vcmask 1043456
    %v70 = vsel %vm69, %v67, %v68
    %vm71 = vcmask 1039360
    %v72 = vsel %vm71, %v64, %v70
    %v73 = vsel %vm71, %v66, %v68
    %76 = vst [vmem:[#allocation2] sm:$0xcc] %v72
    %77 = vst [vmem:[#allocation2 + $0x8] sm:$0xc] %v73
    %v78 = vld [vmem:[%s0] sm:$0xff]
    %v80 = vcombine.high %v78, %v78
    %v82 = vunpack.c.l.s4 1983009808
    %v83 = vunpack.c.0.s8 %v82
    %v84 = vlaneseq
    %v85 = vshrl.u32 %v84, 7
    %v86 = vsub.s32 %v83, %v85
    %v87 = vrot.slane %v78, %v86
    %v89 = vunpack.c.l.s4 1983009808
    %v90 = vunpack.c.0.s8 %v89
    %v91 = vlaneseq
    %v92 = vshrl.u32 %v91, 7
    %v93 = vsub.s32 %v90, %v92
    %v94 = vrot.slane %v80, %v93
    %95 = vrot.lane.b32.xlu0 %v87, 126
    %v96 = vpop.permute.xlu0 %95
    %97 = vrot.lane.b32.xlu0 %v94, 126
    %v98 = vpop.permute.xlu0 %97
    %v99 = vrot.slane %v96, 4
    %v100 = vrot.slane %v98, 4
    %v101 = vsel %vm69, %v99, %v100
    %vm102 = vcmask 1031168
    %v103 = vsel %vm102, %v96, %v101
    %v104 = vsel %vm102, %v98, %v100
    %107 = vst [vmem:[#allocation2 + $0xc] sm:$0x33] %v103
    %108 = vst [vmem:[#allocation2 + $0x14] sm:$0x3] %v104
    %v109 = vld [vmem:[%s0] sm:$0xff]
    %v111 = vcombine.low %v109, %v109
    %v113 = vunpack.c.l.s4 1983009808
    %v114 = vunpack.c.0.s8 %v113
    %v115 = vlaneseq
    %v116 = vshrl.u32 %v115, 7
    %v117 = vsub.s32 %v114, %v116
    %v118 = vrot.slane %v111, %v117
    %v120 = vunpack.c.l.s4 1983009808
    %v121 = vunpack.c.0.s8 %v120
    %v122 = vlaneseq
    %v123 = vshrl.u32 %v122, 7
    %v124 = vsub.s32 %v121, %v123
    %v125 = vrot.slane %v109, %v124
    %126 = vrot.lane.b32.xlu0 %v118, 110
    %v127 = vpop.permute.xlu0 %126
    %128 = vrot.lane.b32.xlu0 %v125, 110
    %v129 = vpop.permute.xlu0 %128
    %v130 = vrot.slane %v127, 4
    %v131 = vrot.slane %v129, 4
    %v132 = vsel %vm69, %v130, %v131
    %vm133 = vcmask 900096
    %v134 = vsel %vm133, %v127, %v132
    %v135 = vsel %vm133, %v129, %v131
    %138 = vst [vmem:[#allocation2 + $0xc] sm:$0xcc] %v134
    %139 = vst [vmem:[#allocation2 + $0x14] sm:$0xc] %v135
    %v140 = vld [vmem:[%s0] sm:$0xff]
    %v142 = vcombine.high %v140, %v140
    %v144 = vunpack.c.l.s4 1983009808
    %v145 = vunpack.c.0.s8 %v144
    %v146 = vlaneseq
    %v147 = vshrl.u32 %v146, 7
    %v148 = vsub.s32 %v145, %v147
    %v149 = vrot.slane %v140, %v148
    %v151 = vunpack.c.l.s4 1983009808
    %v152 = vunpack.c.0.s8 %v151
    %v153 = vlaneseq
    %v154 = vshrl.u32 %v153, 7
    %v155 = vsub.s32 %v152, %v154
    %v156 = vrot.slane %v142, %v155
    %157 = vrot.lane.b32.xlu0 %v149, 109
    %v158 = vpop.permute.xlu0 %157
    %159 = vrot.lane.b32.xlu0 %v156, 109
    %v160 = vpop.permute.xlu0 %159
    %v161 = vrot.slane %v158, 4
    %v162 = vrot.slane %v160, 4
    %v163 = vsel %vm69, %v161, %v162
    %vm164 = vcmask 891904
    %v165 = vsel %vm164, %v158, %v163
    %v166 = vsel %vm164, %v160, %v162
    %169 = vst [vmem:[#allocation2 + $0x18] sm:$0x33] %v165
    %170 = vst [vmem:[#allocation2 + $0x20] sm:$0x3] %v166
    %v171 = vld [vmem:[%s0] sm:$0xff]
    %v173 = vcombine.low %v171, %v171
    %v175 = vunpack.c.l.s4 1983009808
    %v176 = vunpack.c.0.s8 %v175
    %v177 = vlaneseq
    %v178 = vshrl.u32 %v177, 7
    %v179 = vsub.s32 %v176, %v178
    %v180 = vrot.slane %v173, %v179
    %v182 = vunpack.c.l.s4 1983009808
    %v183 = vunpack.c.0.s8 %v182
    %v184 = vlaneseq
    %v185 = vshrl.u32 %v184, 7
    %v186 = vsub.s32 %v183, %v185
    %v187 = vrot.slane %v171, %v186
    %188 = vrot.lane.b32.xlu0 %v180, 108
    %v189 = vpop.permute.xlu0 %188
    %190 = vrot.lane.b32.xlu0 %v187, 108
    %v191 = vpop.permute.xlu0 %190
    %v192 = vrot.slane %v189, 4
    %v193 = vrot.slane %v191, 4
    %v194 = vsel %vm69, %v192, %v193
    %vm195 = vcmask 883712
    %v196 = vsel %vm195, %v189, %v194
    %v197 = vsel %vm195, %v191, %v193
    %200 = vst [vmem:[#allocation2 + $0x18] sm:$0xcc] %v196
    %201 = vst [vmem:[#allocation2 + $0x20] sm:$0xc] %v197
    %v202 = vld [vmem:[%s0] sm:$0xff]
    %v204 = vcombine.high %v202, %v202
    %v206 = vunpack.c.l.s4 1983009808
    %v207 = vunpack.c.0.s8 %v206
    %v208 = vlaneseq
    %v209 = vshrl.u32 %v208, 7
    %v210 = vsub.s32 %v207, %v209
    %v211 = vrot.slane %v202, %v210
    %v213 = vunpack.c.l.s4 1983009808
    %v214 = vunpack.c.0.s8 %v213
    %v215 = vlaneseq
    %v216 = vshrl.u32 %v215, 7
    %v217 = vsub.s32 %v214, %v216
    %v218 = vrot.slane %v204, %v217
    %219 = vrot.lane.b32.xlu0 %v211, 92
    %v220 = vpop.permute.xlu0 %219
    %221 = vrot.lane.b32.xlu0 %v218, 92
    %v222 = vpop.permute.xlu0 %221
    %v223 = vrot.slane %v220, 4
    %v224 = vrot.slane %v222, 4
    %v225 = vsel %vm69, %v223, %v224
    %vm226 = vcmask 752640
    %v227 = vsel %vm226, %v220, %v225
    %v228 = vsel %vm226, %v222, %v224
    %231 = vst [vmem:[#allocation2 + $0x24] sm:$0x33] %v227
    %232 = vst [vmem:[#allocation2 + $0x2c] sm:$0x3] %v228
    %v233 = vld [vmem:[%s0] sm:$0xff]
    %v235 = vcombine.low %v233, %v233
    %v237 = vunpack.c.l.s4 1983009808
    %v238 = vunpack.c.0.s8 %v237
    %v239 = vlaneseq
    %v240 = vshrl.u32 %v239, 7
    %v241 = vsub.s32 %v238, %v240
    %v242 = vrot.slane %v235, %v241
    %v244 = vunpack.c.l.s4 1983009808
    %v245 = vunpack.c.0.s8 %v244
    %v246 = vlaneseq
    %v247 = vshrl.u32 %v246, 7
    %v248 = vsub.s32 %v245, %v247
    %v249 = vrot.slane %v233, %v248
    %250 = vrot.lane.b32.xlu0 %v242, 91
    %v251 = vpop.permute.xlu0 %250
    %252 = vrot.lane.b32.xlu0 %v249, 91
    %v253 = vpop.permute.xlu0 %252
    %v254 = vrot.slane %v251, 4
    %v255 = vrot.slane %v253, 4
    %v256 = vsel %vm69, %v254, %v255
    %vm257 = vcmask 744448
    %v258 = vsel %vm257, %v251, %v256
    %v259 = vsel %vm257, %v253, %v255
    %262 = vst [vmem:[#allocation2 + $0x24] sm:$0xcc] %v258
    %263 = vst [vmem:[#allocation2 + $0x2c] sm:$0xc] %v259
    %v264 = vld [vmem:[%s0] sm:$0xff]
    %v266 = vcombine.high %v264, %v264
    %v268 = vunpack.c.l.s4 1983009808
    %v269 = vunpack.c.0.s8 %v268
    %v270 = vlaneseq
    %v271 = vshrl.u32 %v270, 7
    %v272 = vsub.s32 %v269, %v271
    %v273 = vrot.slane %v264, %v272
    %v275 = vunpack.c.l.s4 1983009808
    %v276 = vunpack.c.0.s8 %v275
    %v277 = vlaneseq
    %v278 = vshrl.u32 %v277, 7
    %v279 = vsub.s32 %v276, %v278
    %v280 = vrot.slane %v266, %v279
    %281 = vrot.lane.b32.xlu0 %v273, 90
    %v282 = vpop.permute.xlu0 %281
    %283 = vrot.lane.b32.xlu0 %v280, 90
    %v284 = vpop.permute.xlu0 %283
    %v285 = vrot.slane %v282, 4
    %v286 = vrot.slane %v284, 4
    %v287 = vsel %vm69, %v285, %v286
    %vm288 = vcmask 736256
    %v289 = vsel %vm288, %v282, %v287
    %v290 = vsel %vm288, %v284, %v286
    %293 = vst [vmem:[#allocation2 + $0x30] sm:$0x33] %v289
    %294 = vst [vmem:[#allocation2 + $0x38] sm:$0x3] %v290
    %v295 = vld [vmem:[%s1] sm:$0xf]
    %v296 = vld [vmem:[#allocation2] sm:$0xff]
    %v297 = vld [vmem:[#allocation2 + $0x8] sm:$0xf]
    %v298 = vld [vmem:[#allocation2 + $0xc] sm:$0xff]
    %v299 = vld [vmem:[#allocation2 + $0x14] sm:$0xf]
    %v300 = vld [vmem:[#allocation2 + $0x18] sm:$0xff]
    %v301 = vld [vmem:[#allocation2 + $0x20] sm:$0xf]
    %v302 = vld [vmem:[#allocation2 + $0x24] sm:$0xff]
    %v303 = vld [vmem:[#allocation2 + $0x2c] sm:$0xf]
    %v304 = vld [vmem:[#allocation2 + $0x30] sm:$0x33]
    %v305 = vld [vmem:[#allocation2 + $0x38] sm:$0x3]
    %v316 = vunpack.c.l.b16 %v296
    %v317 = vunpack.c.h.b16 %v296
    %v318 = vunpack.c.l.b16 %v297
    %v319 = vunpack.c.l.b16 %v298
    %v320 = vunpack.c.h.b16 %v298
    %v321 = vunpack.c.l.b16 %v299
    %v322 = vunpack.c.l.b16 %v300
    %v323 = vunpack.c.h.b16 %v300
    %v324 = vunpack.c.l.b16 %v301
    %v325 = vunpack.c.l.b16 %v302
    %v326 = vunpack.c.h.b16 %v302
    %v327 = vunpack.c.l.b16 %v303
    %v328 = vunpack.c.l.b16 %v304
    %v329 = vunpack.c.h.b16 %v304
    %v330 = vunpack.c.l.b16 %v305
    %v331 = vpack.c.b16 %v319, %v316
    %v332 = vpack.c.b16 %v320, %v317
    %v333 = vpack.c.b16 %v321, %v318
    %v334 = vpack.c.b16 %v325, %v322
    %v335 = vpack.c.b16 %v326, %v323
    %v336 = vpack.c.b16 %v327, %v324
    %v337 = vpack.c.b16 %v328, %v328
    %v338 = vpack.c.b16 %v329, %v329
    %v339 = vpack.c.b16 %v330, %v330
    %vm346 = vcmask 293888
    %v348 = vsel %vm346, %v295, 0
    %vm350 = vcmask 1041408
    %v352 = vsel %vm350, %v337, 0
    %v355 = vsel %vm350, %v338, 0
    %v358 = vsel %vm350, %v339, 0
    %360 = vmatprep.subr.bf16.mxu0 %v332
    %361 = vmatpush1.bf16.msra.mxu0 %v331
    %362 = vmatprep.subr.bf16.mxu0 %v335
    %363 = vmatpush1.bf16.msra.mxu0 %v334
    %364 = vmatprep.subr.bf16.mxu0 %v355
    %365 = vmatpush1.bf16.msra.mxu0 %v352
    %366 = vmatprep.subr.bf16.mxu0 0
    %367 = vmatpush1.bf16.msra.mxu0 0
    %368 = vmatprep.subr.bf16.mxu0 0
    %369 = vmatpush1.bf16.msra.mxu0 0
    %370 = vmatprep.subr.bf16.mxu0 0
    %371 = vmatpush1.bf16.msra.mxu0 0
    %372 = vmatprep.subr.bf16.mxu0 0
    %373 = vmatpush1.bf16.msra.mxu0 0
    %374 = vmatprep.subr.bf16.mxu0 0
    %375 = vmatpush1.bf16.msra.mxu0 0
    %376 = vmatprep.subr.bf16.mxu0 0
    %377 = vmatpush1.bf16.msra.mxu0 0
    %378 = vmatprep.subr.bf16.mxu0 0
    %379 = vmatpush1.bf16.msra.mxu0 0
    %380 = vmatprep.subr.bf16.mxu0 0
    %381 = vmatpush1.bf16.msra.mxu0 0
    %382 = vmatprep.subr.bf16.mxu0 0
    %383 = vmatpush1.bf16.msra.mxu0 0
    %384 = vmatprep.subr.bf16.mxu0 0
    %385 = vmatpush1.bf16.msra.mxu0 0
    %386 = vmatprep.subr.bf16.mxu0 0
    %387 = vmatpush1.bf16.msra.mxu0 0
    %388 = vmatprep.subr.bf16.mxu0 0
    %389 = vmatpush1.bf16.msra.mxu0 0
    %390 = vmatprep.subr.bf16.mxu0 0
    %391 = vmatpush1.bf16.msra.mxu0 0
    %392 = vmatprep.mubr.bf16.mxu0 0
    %393 = vmatmul.mubr.bf16.gmra.mrb[0].mxu0 %v348
    %v394 = vpop.f32.mrb[0].mxu0
    %v395 = vadd.f32 0.0, %v394
    %v396 = vpop.f32.mrb[0].mxu0
    %v397 = vadd.f32 0.0, %v396
    %v398 = vpop.f32.mrb[0].mxu0
    %v399 = vpop.f32.mrb[0].mxu0
    %400 = vdwg.mxu0
    %401 = vmatprep.subr.bf16.mxu0 0
    %402 = vmatpush1.bf16.msra.mxu0 %v333
    %403 = vmatprep.subr.bf16.mxu0 0
    %404 = vmatpush1.bf16.msra.mxu0 %v336
    %405 = vmatprep.subr.bf16.mxu0 0
    %406 = vmatpush1.bf16.msra.mxu0 %v358
    %407 = vmatprep.subr.bf16.mxu0 0
    %408 = vmatpush1.bf16.msra.mxu0 0
    %409 = vmatprep.subr.bf16.mxu0 0
    %410 = vmatpush1.bf16.msra.mxu0 0
    %411 = vmatprep.subr.bf16.mxu0 0
    %412 = vmatpush1.bf16.msra.mxu0 0
    %413 = vmatprep.subr.bf16.mxu0 0
    %414 = vmatpush1.bf16.msra.mxu0 0
    %415 = vmatprep.subr.bf16.mxu0 0
    %416 = vmatpush1.bf16.msra.mxu0 0
    %417 = vmatprep.subr.bf16.mxu0 0
    %418 = vmatpush1.bf16.msra.mxu0 0
    %419 = vmatprep.subr.bf16.mxu0 0
    %420 = vmatpush1.bf16.msra.mxu0 0
    %421 = vmatprep.subr.bf16.mxu0 0
    %422 = vmatpush1.bf16.msra.mxu0 0
    %423 = vmatprep.subr.bf16.mxu0 0
    %424 = vmatpush1.bf16.msra.mxu0 0
    %425 = vmatprep.subr.bf16.mxu0 0
    %426 = vmatpush1.bf16.msra.mxu0 0
    %427 = vmatprep.subr.bf16.mxu0 0
    %428 = vmatpush1.bf16.msra.mxu0 0
    %429 = vmatprep.subr.bf16.mxu0 0
    %430 = vmatpush1.bf16.msra.mxu0 0
    %431 = vmatprep.subr.bf16.mxu0 0
    %432 = vmatpush1.bf16.msra.mxu0 0
    %433 = vmatprep.mubr.bf16.mxu0 0
    %434 = vmatmul.mubr.bf16.gmra.mrb[0].mxu0 %v348
    %v435 = vpop.f32.mrb[0].mxu0
    %v436 = vadd.f32 0.0, %v435
    %v437 = vpop.f32.mrb[0].mxu0
    %v438 = vpop.f32.mrb[0].mxu0
    %v439 = vpop.f32.mrb[0].mxu0
    %440 = vdwg.mxu0
    %v442 = vlaneseq
    %v443 = vshrl.u32 %v442, 7
    %v444 = vsub.s32 0, %v443
    %v445 = vrot.slane %v22, %v444
    %v446 = vlaneseq
    %v447 = vshrl.u32 %v446, 7
    %v448 = vsub.s32 1, %v447
    %v449 = vrot.slane %v22, %v448
    %v450 = vlaneseq
    %v451 = vshrl.u32 %v450, 7
    %v452 = vsub.s32 2, %v451
    %v453 = vrot.slane %v22, %v452
    %v457 = vmul.f32 %v395, %v445
    %v458 = vmul.f32 %v397, %v449
    %v459 = vmul.f32 %v436, %v453
    %v460 = vadd.f32 %v457, %v458
    %v461 = vadd.f32 %v460, %v459
    %462 = vadd.xlane.f32.xlu0 %v461
    %v463 = vpop.xlane.xlu0 %462
    %v464 = vmul.f32 %v457, %v457
    %v465 = vmul.f32 %v458, %v458
    %v466 = vmul.f32 %v459, %v459
    %v467 = vadd.f32 %v464, %v465
    %v468 = vadd.f32 %v467, %v466
    %469 = vadd.xlane.f32.xlu0 %v468
    %v470 = vpop.xlane.xlu0 %469
    %v471 = vmul.f32 %v463, 0.00390625
    %v472 = vmul.f32 %v470, 0.00390625
    %v473 = vmul.f32 %v471, %v471
    %v474 = vsub.f32 %v472, %v473
    %v475 = vmax.f32 %v474, 0.0
    %v476 = vadd.f32 %v475, 0.001
    %v477 = vrsqrt.pop %v476
    %v478 = vmul.f32 %v23, %v477
    %v479 = vmul.f32 %v471, %v478
    %v480 = vsub.f32 %v24, %v479
    %482 = vset.pattern.permute.xlu0 0
    %483 = vperm.xlu0 %482, %v478
    %v484 = vpop.permute.xlu0 %483
    %v486 = vmul.f32 %v395, %v484
    %v487 = vmul.f32 %v397, %v484
    %v488 = vmul.f32 %v436, %v484
    %490 = vset.pattern.permute.xlu0 0
    %491 = vperm.xlu0 %490, %v480
    %v492 = vpop.permute.xlu0 %491
    %v494 = vadd.f32 %v486, %v492
    %v495 = vadd.f32 %v487, %v492
    %v496 = vadd.f32 %v488, %v492
    %v497 = vmax.f32 %v494, 0.0
    %v498 = vmax.f32 %v495, 0.0
    %v499 = vmax.f32 %v496, 0.0
    %v500 = vpack.c.bf16 %v497, %v497
    %v501 = vpack.c.bf16 %v498, %v498
    %v502 = vpack.c.bf16 %v499, %v499
    %v506 = vunpack.c.l.b16 %v500
    %v507 = vunpack.c.l.b16 %v501
    %v508 = vunpack.c.l.b16 %v502
    %v509 = vpack.c.b16 %v507, %v506
    %v510 = vpack.c.b16 %v508, %v508
    %513 = vst [vmem:[#allocation3] sm:$0xff] %v509
    %514 = vst [vmem:[#allocation3 + $0x8] sm:$0xf] %v510
    %s515 = scalar_lea.vmem %s0, 8
    %v516 = vld [vmem:[%s515] sm:$0x3f]
    %v518 = vcombine.high %v516, %v516
    %v520 = vunpack.c.l.s4 1983009808
    %v521 = vunpack.c.0.s8 %v520
    %v522 = vlaneseq
    %v523 = vshrl.u32 %v522, 7
    %v524 = vsub.s32 %v521, %v523
    %v525 = vrot.slane %v516, %v524
    %v527 = vunpack.c.l.s4 1983009808
    %v528 = vunpack.c.0.s8 %v527
    %v529 = vlaneseq
    %v530 = vshrl.u32 %v529, 7
    %v531 = vsub.s32 %v528, %v530
    %v532 = vrot.slane %v518, %v531
    %535 = vst [vmem:[#allocation2] sm:$0x33] %v525
    %536 = vst [vmem:[#allocation2 + $0x8] sm:$0x3] %v532
    %v537 = vld [vmem:[%s515] sm:$0xff]
    %v539 = vcombine.low %v537, %v537
    %v541 = vunpack.c.l.s4 1983009808
    %v542 = vunpack.c.0.s8 %v541
    %v543 = vlaneseq
    %v544 = vshrl.u32 %v543, 7
    %v545 = vsub.s32 %v542, %v544
    %v546 = vrot.slane %v539, %v545
    %v548 = vunpack.c.l.s4 1983009808
    %v549 = vunpack.c.0.s8 %v548
    %v550 = vlaneseq
    %v551 = vshrl.u32 %v550, 7
    %v552 = vsub.s32 %v549, %v551
    %v553 = vrot.slane %v537, %v552
    %554 = vrot.lane.b32.xlu0 %v546, 127
    %v555 = vpop.permute.xlu0 %554
    %556 = vrot.lane.b32.xlu0 %v553, 127
    %v557 = vpop.permute.xlu0 %556
    %v558 = vrot.slane %v555, 4
    %v559 = vrot.slane %v557, 4
    %v560 = vsel %vm69, %v558, %v559
    %v561 = vsel %vm71, %v555, %v560
    %v562 = vsel %vm71, %v557, %v559
    %565 = vst [vmem:[#allocation2] sm:$0xcc] %v561
    %566 = vst [vmem:[#allocation2 + $0x8] sm:$0xc] %v562
    %v567 = vld [vmem:[%s515] sm:$0xff]
    %v569 = vcombine.high %v567, %v567
    %v571 = vunpack.c.l.s4 1983009808
    %v572 = vunpack.c.0.s8 %v571
    %v573 = vlaneseq
    %v574 = vshrl.u32 %v573, 7
    %v575 = vsub.s32 %v572, %v574
    %v576 = vrot.slane %v567, %v575
    %v578 = vunpack.c.l.s4 1983009808
    %v579 = vunpack.c.0.s8 %v578
    %v580 = vlaneseq
    %v581 = vshrl.u32 %v580, 7
    %v582 = vsub.s32 %v579, %v581
    %v583 = vrot.slane %v569, %v582
    %584 = vrot.lane.b32.xlu0 %v576, 126
    %v585 = vpop.permute.xlu0 %584
    %586 = vrot.lane.b32.xlu0 %v583, 126
    %v587 = vpop.permute.xlu0 %586
    %v588 = vrot.slane %v585, 4
    %v589 = vrot.slane %v587, 4
    %v590 = vsel %vm69, %v588, %v589
    %v591 = vsel %vm102, %v585, %v590
    %v592 = vsel %vm102, %v587, %v589
    %595 = vst [vmem:[#allocation2 + $0xc] sm:$0x33] %v591
    %596 = vst [vmem:[#allocation2 + $0x14] sm:$0x3] %v592
    %v597 = vld [vmem:[%s515] sm:$0xff]
    %v599 = vcombine.low %v597, %v597
    %v601 = vunpack.c.l.s4 1983009808
    %v602 = vunpack.c.0.s8 %v601
    %v603 = vlaneseq
    %v604 = vshrl.u32 %v603, 7
    %v605 = vsub.s32 %v602, %v604
    %v606 = vrot.slane %v599, %v605
    %v608 = vunpack.c.l.s4 1983009808
    %v609 = vunpack.c.0.s8 %v608
    %v610 = vlaneseq
    %v611 = vshrl.u32 %v610, 7
    %v612 = vsub.s32 %v609, %v611
    %v613 = vrot.slane %v597, %v612
    %614 = vrot.lane.b32.xlu0 %v606, 110
    %v615 = vpop.permute.xlu0 %614
    %616 = vrot.lane.b32.xlu0 %v613, 110
    %v617 = vpop.permute.xlu0 %616
    %v618 = vrot.slane %v615, 4
    %v619 = vrot.slane %v617, 4
    %v620 = vsel %vm69, %v618, %v619
    %v621 = vsel %vm133, %v615, %v620
    %v622 = vsel %vm133, %v617, %v619
    %625 = vst [vmem:[#allocation2 + $0xc] sm:$0xcc] %v621
    %626 = vst [vmem:[#allocation2 + $0x14] sm:$0xc] %v622
    %v627 = vld [vmem:[%s515] sm:$0xff]
    %v629 = vcombine.high %v627, %v627
    %v631 = vunpack.c.l.s4 1983009808
    %v632 = vunpack.c.0.s8 %v631
    %v633 = vlaneseq
    %v634 = vshrl.u32 %v633, 7
    %v635 = vsub.s32 %v632, %v634
    %v636 = vrot.slane %v627, %v635
    %v638 = vunpack.c.l.s4 1983009808
    %v639 = vunpack.c.0.s8 %v638
    %v640 = vlaneseq
    %v641 = vshrl.u32 %v640, 7
    %v642 = vsub.s32 %v639, %v641
    %v643 = vrot.slane %v629, %v642
    %644 = vrot.lane.b32.xlu0 %v636, 109
    %v645 = vpop.permute.xlu0 %644
    %646 = vrot.lane.b32.xlu0 %v643, 109
    %v647 = vpop.permute.xlu0 %646
    %v648 = vrot.slane %v645, 4
    %v649 = vrot.slane %v647, 4
    %v650 = vsel %vm69, %v648, %v649
    %v651 = vsel %vm164, %v645, %v650
    %v652 = vsel %vm164, %v647, %v649
    %655 = vst [vmem:[#allocation2 + $0x18] sm:$0x33] %v651
    %656 = vst [vmem:[#allocation2 + $0x20] sm:$0x3] %v652
    %v657 = vld [vmem:[%s515] sm:$0xff]
    %v659 = vcombine.low %v657, %v657
    %v661 = vunpack.c.l.s4 1983009808
    %v662 = vunpack.c.0.s8 %v661
    %v663 = vlaneseq
    %v664 = vshrl.u32 %v663, 7
    %v665 = vsub.s32 %v662, %v664
    %v666 = vrot.slane %v659, %v665
    %v668 = vunpack.c.l.s4 1983009808
    %v669 = vunpack.c.0.s8 %v668
    %v670 = vlaneseq
    %v671 = vshrl.u32 %v670, 7
    %v672 = vsub.s32 %v669, %v671
    %v673 = vrot.slane %v657, %v672
    %674 = vrot.lane.b32.xlu0 %v666, 108
    %v675 = vpop.permute.xlu0 %674
    %676 = vrot.lane.b32.xlu0 %v673, 108
    %v677 = vpop.permute.xlu0 %676
    %v678 = vrot.slane %v675, 4
    %v679 = vrot.slane %v677, 4
    %v680 = vsel %vm69, %v678, %v679
    %v681 = vsel %vm195, %v675, %v680
    %v682 = vsel %vm195, %v677, %v679
    %685 = vst [vmem:[#allocation2 + $0x18] sm:$0xcc] %v681
    %686 = vst [vmem:[#allocation2 + $0x20] sm:$0xc] %v682
    %v687 = vld [vmem:[%s515] sm:$0xff]
    %v689 = vcombine.high %v687, %v687
    %v691 = vunpack.c.l.s4 1983009808
    %v692 = vunpack.c.0.s8 %v691
    %v693 = vlaneseq
    %v694 = vshrl.u32 %v693, 7
    %v695 = vsub.s32 %v692, %v694
    %v696 = vrot.slane %v687, %v695
    %v698 = vunpack.c.l.s4 1983009808
    %v699 = vunpack.c.0.s8 %v698
    %v700 = vlaneseq
    %v701 = vshrl.u32 %v700, 7
    %v702 = vsub.s32 %v699, %v701
    %v703 = vrot.slane %v689, %v702
    %704 = vrot.lane.b32.xlu0 %v696, 92
    %v705 = vpop.permute.xlu0 %704
    %706 = vrot.lane.b32.xlu0 %v703, 92
    %v707 = vpop.permute.xlu0 %706
    %v708 = vrot.slane %v705, 4
    %v709 = vrot.slane %v707, 4
    %v710 = vsel %vm69, %v708, %v709
    %v711 = vsel %vm226, %v705, %v710
    %v712 = vsel %vm226, %v707, %v709
    %715 = vst [vmem:[#allocation2 + $0x24] sm:$0x33] %v711
    %716 = vst [vmem:[#allocation2 + $0x2c] sm:$0x3] %v712
    %v717 = vld [vmem:[%s515] sm:$0xff]
    %v719 = vcombine.low %v717, %v717
    %v721 = vunpack.c.l.s4 1983009808
    %v722 = vunpack.c.0.s8 %v721
    %v723 = vlaneseq
    %v724 = vshrl.u32 %v723, 7
    %v725 = vsub.s32 %v722, %v724
    %v726 = vrot.slane %v719, %v725
    %v728 = vunpack.c.l.s4 1983009808
    %v729 = vunpack.c.0.s8 %v728
    %v730 = vlaneseq
    %v731 = vshrl.u32 %v730, 7
    %v732 = vsub.s32 %v729, %v731
    %v733 = vrot.slane %v717, %v732
    %734 = vrot.lane.b32.xlu0 %v726, 91
    %v735 = vpop.permute.xlu0 %734
    %736 = vrot.lane.b32.xlu0 %v733, 91
    %v737 = vpop.permute.xlu0 %736
    %v738 = vrot.slane %v735, 4
    %v739 = vrot.slane %v737, 4
    %v740 = vsel %vm69, %v738, %v739
    %v741 = vsel %vm257, %v735, %v740
    %v742 = vsel %vm257, %v737, %v739
    %745 = vst [vmem:[#allocation2 + $0x24] sm:$0xcc] %v741
    %746 = vst [vmem:[#allocation2 + $0x2c] sm:$0xc] %v742
    %v747 = vld [vmem:[%s515] sm:$0xff]
    %v749 = vcombine.high %v747, %v747
    %v751 = vunpack.c.l.s4 1983009808
    %v752 = vunpack.c.0.s8 %v751
    %v753 = vlaneseq
    %v754 = vshrl.u32 %v753, 7
    %v755 = vsub.s32 %v752, %v754
    %v756 = vrot.slane %v747, %v755
    %v758 = vunpack.c.l.s4 1983009808
    %v759 = vunpack.c.0.s8 %v758
    %v760 = vlaneseq
    %v761 = vshrl.u32 %v760, 7
    %v762 = vsub.s32 %v759, %v761
    %v763 = vrot.slane %v749, %v762
    %764 = vrot.lane.b32.xlu0 %v756, 90
    %v765 = vpop.permute.xlu0 %764
    %766 = vrot.lane.b32.xlu0 %v763, 90
    %v767 = vpop.permute.xlu0 %766
    %v768 = vrot.slane %v765, 4
    %v769 = vrot.slane %v767, 4
    %v770 = vsel %vm69, %v768, %v769
    %v771 = vsel %vm288, %v765, %v770
    %v772 = vsel %vm288, %v767, %v769
    %775 = vst [vmem:[#allocation2 + $0x30] sm:$0x33] %v771
    %776 = vst [vmem:[#allocation2 + $0x38] sm:$0x3] %v772
    %v777 = vld [vmem:[%s1] sm:$0xf]
    %v778 = vld [vmem:[#allocation2] sm:$0xff]
    %v779 = vld [vmem:[#allocation2 + $0x8] sm:$0xf]
    %v780 = vld [vmem:[#allocation2 + $0xc] sm:$0xff]
    %v781 = vld [vmem:[#allocation2 + $0x14] sm:$0xf]
    %v782 = vld [vmem:[#allocation2 + $0x18] sm:$0xff]
    %v783 = vld [vmem:[#allocation2 + $0x20] sm:$0xf]
    %v784 = vld [vmem:[#allocation2 + $0x24] sm:$0xff]
    %v785 = vld [vmem:[#allocation2 + $0x2c] sm:$0xf]
    %v786 = vld [vmem:[#allocation2 + $0x30] sm:$0x33]
    %v787 = vld [vmem:[#allocation2 + $0x38] sm:$0x3]
    %v798 = vunpack.c.l.b16 %v778
    %v799 = vunpack.c.h.b16 %v778
    %v800 = vunpack.c.l.b16 %v779
    %v801 = vunpack.c.l.b16 %v780
    %v802 = vunpack.c.h.b16 %v780
    %v803 = vunpack.c.l.b16 %v781
    %v804 = vunpack.c.l.b16 %v782
    %v805 = vunpack.c.h.b16 %v782
    %v806 = vunpack.c.l.b16 %v783
    %v807 = vunpack.c.l.b16 %v784
    %v808 = vunpack.c.h.b16 %v784
    %v809 = vunpack.c.l.b16 %v785
    %v810 = vunpack.c.l.b16 %v786
    %v811 = vunpack.c.h.b16 %v786
    %v812 = vunpack.c.l.b16 %v787
    %v813 = vpack.c.b16 %v801, %v798
    %v814 = vpack.c.b16 %v802, %v799
    %v815 = vpack.c.b16 %v803, %v800
    %v816 = vpack.c.b16 %v807, %v804
    %v817 = vpack.c.b16 %v808, %v805
    %v818 = vpack.c.b16 %v809, %v806
    %v819 = vpack.c.b16 %v810, %v810
    %v820 = vpack.c.b16 %v811, %v811
    %v821 = vpack.c.b16 %v812, %v812
    %v829 = vsel %vm346, %v777, 0
    %v832 = vsel %vm350, %v819, 0
    %v835 = vsel %vm350, %v820, 0
    %v838 = vsel %vm350, %v821, 0
    %840 = vmatprep.subr.bf16.mxu0 %v814
    %841 = vmatpush1.bf16.msra.mxu0 %v813
    %842 = vmatprep.subr.bf16.mxu0 %v817
    %843 = vmatpush1.bf16.msra.mxu0 %v816
    %844 = vmatprep.subr.bf16.mxu0 %v835
    %845 = vmatpush1.bf16.msra.mxu0 %v832
    %846 = vmatprep.subr.bf16.mxu0 0
    %847 = vmatpush1.bf16.msra.mxu0 0
    %848 = vmatprep.subr.bf16.mxu0 0
    %849 = vmatpush1.bf16.msra.mxu0 0
    %850 = vmatprep.subr.bf16.mxu0 0
    %851 = vmatpush1.bf16.msra.mxu0 0
    %852 = vmatprep.subr.bf16.mxu0 0
    %853 = vmatpush1.bf16.msra.mxu0 0
    %854 = vmatprep.subr.bf16.mxu0 0
    %855 = vmatpush1.bf16.msra.mxu0 0
    %856 = vmatprep.subr.bf16.mxu0 0
    %857 = vmatpush1.bf16.msra.mxu0 0
    %858 = vmatprep.subr.bf16.mxu0 0
    %859 = vmatpush1.bf16.msra.mxu0 0
    %860 = vmatprep.subr.bf16.mxu0 0
    %861 = vmatpush1.bf16.msra.mxu0 0
    %862 = vmatprep.subr.bf16.mxu0 0
    %863 = vmatpush1.bf16.msra.mxu0 0
    %864 = vmatprep.subr.bf16.mxu0 0
    %865 = vmatpush1.bf16.msra.mxu0 0
    %866 = vmatprep.subr.bf16.mxu0 0
    %867 = vmatpush1.bf16.msra.mxu0 0
    %868 = vmatprep.subr.bf16.mxu0 0
    %869 = vmatpush1.bf16.msra.mxu0 0
    %870 = vmatprep.subr.bf16.mxu0 0
    %871 = vmatpush1.bf16.msra.mxu0 0
    %872 = vmatprep.mubr.bf16.mxu0 0
    %873 = vmatmul.mubr.bf16.gmra.mrb[0].mxu0 %v829
    %v874 = vpop.f32.mrb[0].mxu0
    %v875 = vadd.f32 0.0, %v874
    %v876 = vpop.f32.mrb[0].mxu0
    %v877 = vadd.f32 0.0, %v876
    %v878 = vpop.f32.mrb[0].mxu0
    %v879 = vpop.f32.mrb[0].mxu0
    %880 = vdwg.mxu0
    %881 = vmatprep.subr.bf16.mxu0 0
    %882 = vmatpush1.bf16.msra.mxu0 %v815
    %883 = vmatprep.subr.bf16.mxu0 0
    %884 = vmatpush1.bf16.msra.mxu0 %v818
    %885 = vmatprep.subr.bf16.mxu0 0
    %886 = vmatpush1.bf16.msra.mxu0 %v838
    %887 = vmatprep.subr.bf16.mxu0 0
    %888 = vmatpush1.bf16.msra.mxu0 0
    %889 = vmatprep.subr.bf16.mxu0 0
    %890 = vmatpush1.bf16.msra.mxu0 0
    %891 = vmatprep.subr.bf16.mxu0 0
    %892 = vmatpush1.bf16.msra.mxu0 0
    %893 = vmatprep.subr.bf16.mxu0 0
    %894 = vmatpush1.bf16.msra.mxu0 0
    %895 = vmatprep.subr.bf16.mxu0 0
    %896 = vmatpush1.bf16.msra.mxu0 0
    %897 = vmatprep.subr.bf16.mxu0 0
    %898 = vmatpush1.bf16.msra.mxu0 0
    %899 = vmatprep.subr.bf16.mxu0 0
    %900 = vmatpush1.bf16.msra.mxu0 0
    %901 = vmatprep.subr.bf16.mxu0 0
    %902 = vmatpush1.bf16.msra.mxu0 0
    %903 = vmatprep.subr.bf16.mxu0 0
    %904 = vmatpush1.bf16.msra.mxu0 0
    %905 = vmatprep.subr.bf16.mxu0 0
    %906 = vmatpush1.bf16.msra.mxu0 0
    %907 = vmatprep.subr.bf16.mxu0 0
    %908 = vmatpush1.bf16.msra.mxu0 0
    %909 = vmatprep.subr.bf16.mxu0 0
    %910 = vmatpush1.bf16.msra.mxu0 0
    %911 = vmatprep.subr.bf16.mxu0 0
    %912 = vmatpush1.bf16.msra.mxu0 0
    %913 = vmatprep.mubr.bf16.mxu0 0
    %914 = vmatmul.mubr.bf16.gmra.mrb[0].mxu0 %v829
    %v915 = vpop.f32.mrb[0].mxu0
    %v916 = vadd.f32 0.0, %v915
    %v917 = vpop.f32.mrb[0].mxu0
    %v918 = vpop.f32.mrb[0].mxu0
    %v919 = vpop.f32.mrb[0].mxu0
    %920 = vdwg.mxu0
    %v921 = vmul.f32 %v875, %v445
    %v922 = vmul.f32 %v877, %v449
    %v923 = vmul.f32 %v916, %v453
    %v924 = vadd.f32 %v921, %v922
    %v925 = vadd.f32 %v924, %v923
    %926 = vadd.xlane.f32.xlu0 %v925
    %v927 = vpop.xlane.xlu0 %926
    %v928 = vmul.f32 %v921, %v921
    %v929 = vmul.f32 %v922, %v922
    %v930 = vmul.f32 %v923, %v923
    %v931 = vadd.f32 %v928, %v929
    %v932 = vadd.f32 %v931, %v930
    %933 = vadd.xlane.f32.xlu0 %v932
    %v934 = vpop.xlane.xlu0 %933
    %v935 = vmul.f32 %v927, 0.00390625
    %v936 = vmul.f32 %v934, 0.00390625
    %v937 = vmul.f32 %v935, %v935
    %v938 = vsub.f32 %v936, %v937
    %v939 = vmax.f32 %v938, 0.0
    %v940 = vadd.f32 %v939, 0.001
    %v941 = vrsqrt.pop %v940
    %v942 = vmul.f32 %v23, %v941
    %v943 = vmul.f32 %v935, %v942
    %v944 = vsub.f32 %v24, %v943
    %946 = vset.pattern.permute.xlu0 0
    %947 = vperm.xlu0 %946, %v942
    %v948 = vpop.permute.xlu0 %947
    %v950 = vmul.f32 %v875, %v948
    %v951 = vmul.f32 %v877, %v948
    %v952 = vmul.f32 %v916, %v948
    %954 = vset.pattern.permute.xlu0 0
    %955 = vperm.xlu0 %954, %v944
    %v956 = vpop.permute.xlu0 %955
    %v958 = vadd.f32 %v950, %v956
    %v959 = vadd.f32 %v951, %v956
    %v960 = vadd.f32 %v952, %v956
    %v961 = vmax.f32 %v958, 0.0
    %v962 = vmax.f32 %v959, 0.0
    %v963 = vmax.f32 %v960, 0.0
    %v964 = vpack.c.bf16 %v961, %v961
    %v965 = vpack.c.bf16 %v962, %v962
    %v966 = vpack.c.bf16 %v963, %v963
    %v970 = vunpack.c.l.b16 %v964
    %v971 = vunpack.c.l.b16 %v965
    %v972 = vunpack.c.l.b16 %v966
    %v973 = vpack.c.b16 %v971, %v970
    %v974 = vpack.c.b16 %v972, %v972
    %s977 = scalar_lea.vmem [#allocation3], 12
    %978 = vst [vmem:[%s977] sm:$0xff] %v973
    %979 = vst [vmem:[%s977 + $0x8] sm:$0xf] %v974
    // Predicated region
    $region22: #{tpu_custom_call.1} parent=1 // pred_check
      _
    $region23: #{tpu_custom_call.1} parent=1 // pred_check_branch
      %981 = sbr.rel (0) target = $region25
    $region24: #{tpu_custom_call.1} parent=1 // pred_region
      %s983 = ssub.s32 384, 384
      %984 = vsyncadd [#allocation4], %s983
      %s985 = sshll.u32 [#allocation3], 4
      %s986 = int_to_ptr.vmem [resolvable:$true] %s985
      %991 = dma.vmem_to_hbm [thread:$0]  %s986, 384, %s5, [#allocation4], 192, 192, 12
    $region25: #{tpu_custom_call.1} parent=1 // pred_fallthru
      _
    // Predicated region
    $region26: #{tpu_custom_call.1} parent=1 // pred_check
      _
    $region27: #{tpu_custom_call.1} parent=1 // pred_check_branch
      %993 = sbr.rel (0) target = $region29
    $region28: #{tpu_custom_call.1} parent=1 // pred_region
      %994 = dma.done [#allocation4], 384
    $region29: #{tpu_custom_call.1} parent=1 // pred_fallthru
      _
    %995 = vsyncpa [#allocation4], 1

</llo_original>
